<compile_context>
chip_gen: v7x
topology: tpu7x:2x2x1
jax: 0.10.0
libtpu: 0.0.40
codegen_flags: <defaults>
</compile_context>

<pallas_src>
import functools

import jax
import jax.numpy as jnp
from jax import lax
from jax.experimental import pallas as pl
from jax.experimental.pallas import tpu as pltpu


def _adapter_kernel(x_ref, n_ref, wt_ref, b_ref, o_ref):
    """One (row-tile, copy) grid cell.

    x_ref  : (tm, C)  clean input rows
    n_ref  : (tm, C)  Gaussian noise rows (used only for copy > 0)
    wt_ref : (C, C)   nn.Linear weight, pre-transposed (out = x_n @ wt)
    b_ref  : (1, C)   nn.Linear bias
    o_ref  : (tm, C)  output rows for this copy (leading copy dim squeezed)
    """
    add_noise = (pl.program_id(1) > 0).astype(x_ref.dtype)
    x = x_ref[...] + add_noise * n_ref[...]

    # img / img.norm(dim=-1, keepdim=True): rsqrt + multiply (EUP + VPU).
    # NOTE: matches torch exactly (no epsilon) -> an all-zero row yields NaN;
    # zero pad rows only ever produce NaN in the discarded tail region.
    ss = jnp.sum(x * x, axis=-1, keepdims=True)
    x_n = x * lax.rsqrt(ss)

    # nn.Linear(C, C): x_n @ W^T + b  (weight arrives already transposed).
    out = jnp.dot(x_n, wt_ref[...], preferred_element_type=jnp.float32)
    out = out + b_ref[...]

    # 0.5 * x + 0.5 * adapter(x)   (residual uses the RAW, un-normalized x).
    o_ref[...] = (0.5 * x + 0.5 * out).astype(o_ref.dtype)


def _round_up(a, m):
    return ((a + m - 1) // m) * m


def _adapter_pallas(x2d, noise2d, w_t, b2d, num_copies, *,
                    max_tm=4096, vmem_budget_bytes=24 * 1024 * 1024):
    """x2d / noise2d: (L, C).  Returns (num_copies, L, C)."""
    L, C = x2d.shape
    itemsize = jnp.dtype(x2d.dtype).itemsize

    # Row tile: three row-sized buffers (x, noise, out), each double-buffered.
    tm = max(8, vmem_budget_bytes // (6 * C * itemsize))
    tm = min(tm, max_tm, _round_up(L, 8))
    tm = max(8, (tm // 8) * 8)

    L_pad = _round_up(L, tm)
    if L_pad != L:
        pad = ((0, L_pad - L), (0, 0))
        x2d = jnp.pad(x2d, pad)
        noise2d = jnp.pad(noise2d, pad)

    out = pl.pallas_call(
        _adapter_kernel,
        out_shape=jax.ShapeDtypeStruct((num_copies, L_pad, C), x2d.dtype),
        grid_spec=pltpu.PrefetchScalarGridSpec(
            num_scalar_prefetch=0,
            grid=(L_pad // tm, num_copies),          # copy axis innermost
            in_specs=[
                pl.BlockSpec((tm, C), lambda i, c: (i, 0)),   # x rows
                pl.BlockSpec((tm, C), lambda i, c: (i, 0)),   # noise rows
                pl.BlockSpec((C, C), lambda i, c: (0, 0)),    # W^T (resident)
                pl.BlockSpec((1, C), lambda i, c: (0, 0)),    # bias
            ],
            out_specs=pl.BlockSpec((None, tm, C), lambda i, c: (c, i, 0)),
        ),
        compiler_params=pltpu.CompilerParams(
            dimension_semantics=("parallel", "arbitrary")),
    )(x2d, noise2d, w_t, b2d)
    return out[:, :L, :]


def adapter_forward(x, w_ad, b_ad, *, noise_key=None, is_test=False,
                    noise_level=1, max_tm=4096):
    """Adapter.forward for the 4-D (N, H, W, C) input branch."""
    N, H, W, C = x.shape
    L = N * H * W
    x2d = x.reshape(L, C)
    w_t = w_ad.T                       # transpose once, outside the kernel
    b2d = b_ad.reshape(1, C)

    if is_test:
        noise2d = jnp.zeros_like(x2d)  # copy axis has size 1; noise unused
        out = _adapter_pallas(x2d, noise2d, w_t, b2d, 1, max_tm=max_tm)
        return out.reshape(N, H, W, C)

    # aug(): one noisy copy (noise_level == 1), std = 0.05 * 1.1**1.
    # Noise stays on jax.random so the math is bit-exact vs the reference;
    # the stacked (2N, H, W, C) tensor is never materialized -- the copy grid
    # axis writes both the clean and noisy results straight from the single x.
    # TODO(synk): generate the noise in-kernel (pltpu.prng_random_bits) to
    # drop the noise HBM read; not bit-identical to jax.random.normal.
    assert noise_level == 1, "kernel copy axis is specialized to one noise copy"
    std = 0.05 * 1.1
    noise2d = std * jax.random.normal(noise_key, (L, C), dtype=x.dtype)
    out = _adapter_pallas(x2d, noise2d, w_t, b2d, 2, max_tm=max_tm)  # (2,L,C)
    return out.reshape(2 * N, H, W, C)


if __name__ == "__main__":
    key = jax.random.PRNGKey(0)
    k_te, k_w, k_b, k_x, k_noise = jax.random.split(key, 5)

    # Module construction: text_embeddings arrives as (K, C, 2); __init__
    # concatenates the two halves along dim 0 -> (2K, C).  Only C (the
    # in/out features of the Linear) matters for the forward pass.
    K, C = 8, 128
    te_raw = jax.random.normal(k_te, (K, C, 2), dtype=jnp.float32)
    text_emb = jnp.concatenate([te_raw[..., 0], te_raw[..., 1]], axis=0)
    assert text_emb.shape[1] == C

    # nn.Linear(C, C): weight (C, C), bias (C,) -- synthetic uniform init.
    bound = 1.0 / jnp.sqrt(C)
    w_ad = jax.random.uniform(k_w, (C, C), jnp.float32, -bound, bound)
    b_ad = jax.random.uniform(k_b, (C,), jnp.float32, -bound, bound)

    # Small NHWC feature map.
    N, H, W = 2, 4, 4
    x = jax.random.normal(k_x, (N, H, W, C), dtype=jnp.float32)

    # Pure-JAX reference (same noise draw as the wrapper).
    L = N * H * W
    std = 0.05 * 1.1
    noise2d = std * jax.random.normal(k_noise, (L, C), dtype=x.dtype)
    v = x.reshape(L, C)
    v_aug = jnp.concatenate([v, v + noise2d], axis=0)                # (2L, C)
    v_n = v_aug / jnp.linalg.norm(v_aug, axis=-1, keepdims=True)
    ref = 0.5 * v_aug + 0.5 * (
        jnp.dot(v_n, w_ad.T, precision=lax.Precision.HIGHEST) + b_ad)
    ref = ref.reshape(2 * N, H, W, C)

    # 1) default config (here: a single large row tile covering all rows).
    fwd = jax.jit(functools.partial(adapter_forward, noise_key=k_noise,
                                    is_test=False))
    y = fwd(x, w_ad, b_ad)
    jax.block_until_ready(y)
    assert y.shape == (2 * N, H, W, C)
    assert jnp.allclose(y, ref, atol=1e-3, rtol=1e-3)

    # 2) tiny forced tile to exercise the multi-row-tile + padded-tail path
    #    (L = 32 rows, tm = 24 -> 2 row tiles, 16 padded rows discarded).
    fwd_tiled = jax.jit(functools.partial(adapter_forward, noise_key=k_noise,
                                          is_test=False, max_tm=24))
    y2 = fwd_tiled(x, w_ad, b_ad)
    jax.block_until_ready(y2)
    assert jnp.allclose(y2, ref, atol=1e-3, rtol=1e-3)

    print("KERNEL_OK")
</pallas_src>

<mosaic_0001>
module attributes {stable_mosaic.version = 11 : i64} {
  func.func @_adapter_kernel(%arg0: i32, %arg1: i32, %arg2: memref<32x128xf32, #tpu.memory_space<vmem>>, %arg3: memref<32x128xf32, #tpu.memory_space<vmem>>, %arg4: memref<128x128xf32, #tpu.memory_space<vmem>>, %arg5: memref<1x128xf32, #tpu.memory_space<vmem>>, %arg6: memref<1x32x128xf32, #tpu.memory_space<vmem>>) attributes {dimension_semantics = [#tpu.dimension_semantics<parallel>, #tpu.dimension_semantics<arbitrary>], iteration_bounds = array<i64: 1, 2>, scalar_prefetch = 0 : i64, scratch_operands = 0 : i64, tpu.core_type = #tpu.core_type<tc>, window_params = [{transform_indices = @transform_0, window_bounds = array<i64: 32, 128>}, {transform_indices = @transform_1, window_bounds = array<i64: 32, 128>}, {pipeline_mode = #tpu.pipeline_mode<synchronous>, transform_indices = @transform_2, window_bounds = array<i64: 128, 128>}, {pipeline_mode = #tpu.pipeline_mode<synchronous>, transform_indices = @transform_3, window_bounds = array<i64: 1, 128>}, {transform_indices = @transform_4, window_bounds = array<i64: 1, 32, 128>}]} {
    %c0_i32 = arith.constant 0 : i32
    %0 = arith.cmpi sgt, %arg1, %c0_i32 : i32
    %1 = arith.extui %0 : i1 to i32
    %2 = arith.sitofp %1 : i32 to f32
    %c0 = arith.constant 0 : index
    %c0_0 = arith.constant 0 : index
    %3 = vector.load %arg2[%c0, %c0_0] : memref<32x128xf32, #tpu.memory_space<vmem>>, vector<32x128xf32>
    %c0_1 = arith.constant 0 : index
    %c0_2 = arith.constant 0 : index
    %4 = vector.load %arg3[%c0_1, %c0_2] : memref<32x128xf32, #tpu.memory_space<vmem>>, vector<32x128xf32>
    %5 = vector.broadcast %2 : f32 to vector<32x128xf32>
    %6 = arith.mulf %5, %4 : vector<32x128xf32>
    %7 = arith.addf %3, %6 : vector<32x128xf32>
    %8 = arith.mulf %7, %7 : vector<32x128xf32>
    %cst = arith.constant dense<0.000000e+00> : vector<32xf32>
    %9 = vector.multi_reduction <add>, %8, %cst [1] : vector<32x128xf32> to vector<32xf32>
    %10 = vector.shape_cast %9 : vector<32xf32> to vector<32x1xf32>
    %11 = math.rsqrt %10 : vector<32x1xf32>
    %12 = vector.broadcast %11 : vector<32x1xf32> to vector<32x128xf32>
    %13 = arith.mulf %7, %12 : vector<32x128xf32>
    %c0_3 = arith.constant 0 : index
    %c0_4 = arith.constant 0 : index
    %14 = vector.load %arg4[%c0_3, %c0_4] : memref<128x128xf32, #tpu.memory_space<vmem>>, vector<128x128xf32>
    %cst_5 = arith.constant dense<0.000000e+00> : vector<32x128xf32>
    %15 = tpu.matmul %13, %14, %cst_5 {dimension_numbers = #tpu.dot_dimension_numbers<[1], [0], [0], [1], [0, 0, 1, 1], [], []>} : vector<32x128xf32>, vector<128x128xf32>, vector<32x128xf32> -> vector<32x128xf32>
    %c0_6 = arith.constant 0 : index
    %c0_7 = arith.constant 0 : index
    %16 = vector.load %arg5[%c0_6, %c0_7] : memref<1x128xf32, #tpu.memory_space<vmem>>, vector<1x128xf32>
    %17 = vector.broadcast %16 : vector<1x128xf32> to vector<32x128xf32>
    %18 = arith.addf %15, %17 : vector<32x128xf32>
    %cst_8 = arith.constant 5.000000e-01 : f32
    %19 = vector.broadcast %cst_8 : f32 to vector<32x128xf32>
    %20 = arith.mulf %19, %7 : vector<32x128xf32>
    %cst_9 = arith.constant 5.000000e-01 : f32
    %21 = vector.broadcast %cst_9 : f32 to vector<32x128xf32>
    %22 = arith.mulf %21, %18 : vector<32x128xf32>
    %23 = arith.addf %20, %22 : vector<32x128xf32>
    %c0_10 = arith.constant 0 : index
    %c0_11 = arith.constant 0 : index
    %c0_12 = arith.constant 0 : index
    %24 = vector.load %arg6[%c0_10, %c0_11, %c0_12] : memref<1x32x128xf32, #tpu.memory_space<vmem>>, vector<1x32x128xf32>
    %25 = vector.shape_cast %24 : vector<1x32x128xf32> to vector<32x128xf32>
    %26 = vector.shape_cast %23 : vector<32x128xf32> to vector<1x32x128xf32>
    tpu.vector_store %arg6[%c0_10, %c0_11, %c0_12], %26 {strides = array<i32>} : memref<1x32x128xf32, #tpu.memory_space<vmem>>, vector<1x32x128xf32>,
    return
  }
  func.func @transform_0(%arg0: i32, %arg1: i32) -> (i32, i32) {
    %c0_i32 = arith.constant 0 : i32
    %c0_i32_0 = arith.constant 0 : i32
    return %arg0, %c0_i32 : i32, i32
  }
  func.func @transform_1(%arg0: i32, %arg1: i32) -> (i32, i32) {
    %c0_i32 = arith.constant 0 : i32
    %c0_i32_0 = arith.constant 0 : i32
    return %arg0, %c0_i32 : i32, i32
  }
  func.func @transform_2(%arg0: i32, %arg1: i32) -> (i32, i32) {
    %c0_i32 = arith.constant 0 : i32
    %c0_i32_0 = arith.constant 0 : i32
    %c0_i32_1 = arith.constant 0 : i32
    return %c0_i32, %c0_i32_0 : i32, i32
  }
  func.func @transform_3(%arg0: i32, %arg1: i32) -> (i32, i32) {
    %c0_i32 = arith.constant 0 : i32
    %c0_i32_0 = arith.constant 0 : i32
    %c0_i32_1 = arith.constant 0 : i32
    return %c0_i32, %c0_i32_0 : i32, i32
  }
  func.func @transform_4(%arg0: i32, %arg1: i32) -> (i32, i32, i32) {
    %c0_i32 = arith.constant 0 : i32
    %c0_i32_0 = arith.constant 0 : i32
    return %arg1, %arg0, %c0_i32 : i32, i32, i32
  }
}

</mosaic_0001>

<llo_original>
// kernel: adapter_forward.1
$region0: #{adapter_forward.1}
  #allocation0 [shape = 'u32[]', space=smem, size = 0x4, offset = 0x4, fixed_abs, tag = 'smem constant byte address 0x4 - core index']
  #allocation1 [shape = 'u32[144,128]{1,0:T(1,128)}', space=vmem, size = 0x12000, scoped, tag = 'internal scratch']
  %s0 = inlined_call_operand.vmem [shape: f32[32,128], index: 0, kind: input, shape index: {}]
  %s1 = inlined_call_operand.vmem [shape: f32[32,128], index: 1, kind: input, shape index: {}]
  %s2 = inlined_call_operand.vmem [shape: f32[128,128], index: 2, kind: input, shape index: {}]
  %s3 = inlined_call_operand.vmem [shape: f32[1,128], index: 3, kind: input, shape index: {}]
  %s4 = inlined_call_operand.hbm [shape: f32[2,32,128], index: 4, kind: output, shape index: {}]
  %s5 = sld [smem:[#allocation0]]
  $region49: #{adapter_forward.1} parent=0
    _
  %s7 = ssub.s32 1, %s5
  %s8 = scalar_select 0, %s7, %s5
  $region1: #{adapter_forward.1} parent=0
    #allocation2 [shape = 'u8[32768]{0}', space=vmem, size = 0x8000, scoped, tag = 'output window, operand 0']
    #allocation3 [shape = 's32[2]{0}', space=sflag, size = 0x8, scoped, tag = 'scoped memory for adapter_forward.1']
    %9 = vsyncpa [#allocation3], 0
    %s10 = scalar_lea.sflag [#allocation3], 1
    %11 = vsyncpa %s10, 0
    loop: start=0, step=1, limit=4
    $region2: #{adapter_forward.1} parent=1 // loop_pre_header
      _
    $region3: #{adapter_forward.1} parent=1 // loop_header
      %s13 = sphi 0, %s17
      %p14 = scmp.ge.s32.totalorder %s13, 4
      %s20 = sphi 0, %s32
      %s21 = sphi 0, %s28
      %s22 = sphi 0, %s20
      %s23 = sphi 0, %s21
      %s24 = sphi 0, %s22
      %s25 = sphi 0, %s23
      %s35 = sphi 0, %s37
      %s38 = sphi 0, %s35
      %s39 = sphi 0, %s38
      %s55 = sphi 0, %s39
      %s61 = sphi 0, %s63
      %s64 = sphi 0, %s61
      %s65 = sphi 0, %s64
      %s81 = sphi 0, %s65
      %s85 = sphi 0, %s85
      %s87 = sphi 0, %s85
      %s88 = sphi 0, %s87
      %s102 = sphi 0, %s88
      %s106 = sphi 0, %s106
      %s108 = sphi 0, %s106
      %s109 = sphi 0, %s108
      %s123 = sphi 0, %s109
      %s131 = sphi 0, %s133
      %s134 = sphi 0, %s131
      %s135 = sphi 0, %s134
      %s151 = sphi 0, %s135
    $region4: #{adapter_forward.1} parent=1 // loop_header_branch
      %16 = sbr.rel (%p14) target = $region8
    $region5: #{adapter_forward.1} parent=1 // loop_body
      %s18 = ssub.s32 %s13, 1
      %s19 = ssub.s32 %s13, 2
      %s26 = sadd.s32 1, %s21
      %p27 = scmp.ge.s32.totalorder %s26, 2
      %s28 = scalar_select %p27, 0, %s26
      %s29 = sadd.s32 1, %s20
      %s30 = scalar_select %p27, %s29, %s20
      %p31 = scmp.ge.s32.totalorder %s30, 1
      %s32 = scalar_select %p31, 0, %s30
      %s33 = ssub.s32 %s20, %s32
      %p34 = scmp.eq.s32.totalorder %s33, 0
      %s36 = sadd.s32 %s35, 1
      %s37 = scalar_select %p34, %s35, %s36
      %p40 = pneg %p34
      %p41 = scmp.eq.s32.totalorder %s13, 1
      %p42 = por %p40, %p41
      %p43 = scmp.ne.s32.totalorder %s35, %s38
      %p44 = scmp.eq.s32.totalorder %s13, 0
      %p45 = por %p43, %p44
      %p46 = scmp.ne.s32.totalorder %s35, %s38
      %p47 = scmp.eq.s32.totalorder %s18, 1
      %p48 = por %p46, %p47
      %p49 = scmp.ne.s32.totalorder %s38, %s39
      %p50 = scmp.eq.s32.totalorder %s18, 0
      %p51 = por %p49, %p50
      %p52 = scmp.ne.s32.totalorder %s38, %s39
      %p53 = scmp.eq.s32.totalorder %s19, 1
      %p54 = por %p52, %p53
      %p56 = scmp.ne.s32.totalorder %s39, %s55
      %p57 = scmp.eq.s32.totalorder %s19, 0
      %p58 = por %p56, %p57
      %s59 = ssub.s32 %s20, %s32
      %p60 = scmp.eq.s32.totalorder %s59, 0
      %s62 = sadd.s32 %s61, 1
      %s63 = scalar_select %p60, %s61, %s62
      %p66 = pneg %p60
      %p67 = scmp.eq.s32.totalorder %s13, 1
      %p68 = por %p66, %p67
      %p69 = scmp.ne.s32.totalorder %s61, %s64
      %p70 = scmp.eq.s32.totalorder %s13, 0
      %p71 = por %p69, %p70
      %p72 = scmp.ne.s32.totalorder %s61, %s64
      %p73 = scmp.eq.s32.totalorder %s18, 1
      %p74 = por %p72, %p73
      %p75 = scmp.ne.s32.totalorder %s64, %s65
      %p76 = scmp.eq.s32.totalorder %s18, 0
      %p77 = por %p75, %p76
      %p78 = scmp.ne.s32.totalorder %s64, %s65
      %p79 = scmp.eq.s32.totalorder %s19, 1
      %p80 = por %p78, %p79
      %p82 = scmp.ne.s32.totalorder %s65, %s81
      %p83 = scmp.eq.s32.totalorder %s19, 0
      %p84 = por %p82, %p83
      %s86 = sadd.s32 %s85, 1
      %p89 = scmp.eq.s32.totalorder %s13, 1
      %p90 = scmp.ne.s32.totalorder %s85, %s87
      %p91 = scmp.eq.s32.totalorder %s13, 0
      %p92 = por %p90, %p91
      %p93 = scmp.ne.s32.totalorder %s85, %s87
      %p94 = scmp.eq.s32.totalorder %s18, 1
      %p95 = por %p93, %p94
      %p96 = scmp.ne.s32.totalorder %s87, %s88
      %p97 = scmp.eq.s32.totalorder %s18, 0
      %p98 = por %p96, %p97
      %p99 = scmp.ne.s32.totalorder %s87, %s88
      %p100 = scmp.eq.s32.totalorder %s19, 1
      %p101 = por %p99, %p100
      %p103 = scmp.ne.s32.totalorder %s88, %s102
      %p104 = scmp.eq.s32.totalorder %s19, 0
      %p105 = por %p103, %p104
      %s107 = sadd.s32 %s106, 1
      %p110 = scmp.eq.s32.totalorder %s13, 1
      %p111 = scmp.ne.s32.totalorder %s106, %s108
      %p112 = scmp.eq.s32.totalorder %s13, 0
      %p113 = por %p111, %p112
      %p114 = scmp.ne.s32.totalorder %s106, %s108
      %p115 = scmp.eq.s32.totalorder %s18, 1
      %p116 = por %p114, %p115
      %p117 = scmp.ne.s32.totalorder %s108, %s109
      %p118 = scmp.eq.s32.totalorder %s18, 0
      %p119 = por %p117, %p118
      %p120 = scmp.ne.s32.totalorder %s108, %s109
      %p121 = scmp.eq.s32.totalorder %s19, 1
      %p122 = por %p120, %p121
      %p124 = scmp.ne.s32.totalorder %s109, %s123
      %p125 = scmp.eq.s32.totalorder %s19, 0
      %p126 = por %p124, %p125
      %s127 = ssub.s32 %s21, %s28
      %s128 = ssub.s32 %s20, %s32
      %s129 = sor.u32 %s127, %s128
      %p130 = scmp.eq.s32.totalorder %s129, 0
      %s132 = sadd.s32 %s131, 1
      %s133 = scalar_select %p130, %s131, %s132
      %p136 = pneg %p130
      %p137 = scmp.eq.s32.totalorder %s13, 1
      %p138 = por %p136, %p137
      %p139 = scmp.ne.s32.totalorder %s131, %s134
      %p140 = scmp.eq.s32.totalorder %s13, 0
      %p141 = por %p139, %p140
      %p142 = scmp.ne.s32.totalorder %s131, %s134
      %p143 = scmp.eq.s32.totalorder %s18, 1
      %p144 = por %p142, %p143
      %p145 = scmp.ne.s32.totalorder %s134, %s135
      %p146 = scmp.eq.s32.totalorder %s18, 0
      %p147 = por %p145, %p146
      %p148 = scmp.ne.s32.totalorder %s134, %s135
      %p149 = scmp.eq.s32.totalorder %s19, 1
      %p150 = por %p148, %p149
      %p152 = scmp.ne.s32.totalorder %s135, %s151
      %p153 = scmp.eq.s32.totalorder %s19, 0
      %p154 = por %p152, %p153
      %p155 = scmp.le.s32.totalorder 1, %s13
      %p156 = scmp.lt.s32.totalorder %s13, 3
      %p157 = pnand %p155, %p156
      %p158 = pneg %p157
      // Predicated region
      $region9: #{adapter_forward.1} parent=5 // pred_check
        _
      $region10: #{adapter_forward.1} parent=5 // pred_check_branch
        %160 = sbr.rel (%p157) target = $region12
      $region11: #{adapter_forward.1} parent=5 // pred_region
        %s161 = ssub.s32 %s13, 1
        // Predicated region
        $region13: #{adapter_forward.1} parent=11 // pred_check
          %p162 = pneg %p51
        $region14: #{adapter_forward.1} parent=11 // pred_check_branch
          %164 = sbr.rel (%p162) target = $region16
        $region15: #{adapter_forward.1} parent=11 // pred_region
          %s165 = smul.u32 4, %s22
          %p166 = scmp.lt.s32.totalorder %s165, 3
          %s167 = scalar_select %p166, %s165, 3
          %s168 = smul.addr %s167, 8
          %s169 = scalar_lea.vmem %s0, %s168
          %s170 = smul.u32 4, %s22
        $region16: #{adapter_forward.1} parent=11 // pred_fallthru
          _
        // Predicated region
        $region17: #{adapter_forward.1} parent=11 // pred_check
          %p171 = pneg %p77
        $region18: #{adapter_forward.1} parent=11 // pred_check_branch
          %173 = sbr.rel (%p171) target = $region20
        $region19: #{adapter_forward.1} parent=11 // pred_region
          %s174 = smul.u32 4, %s22
          %p175 = scmp.lt.s32.totalorder %s174, 3
          %s176 = scalar_select %p175, %s174, 3
          %s177 = smul.addr %s176, 8
          %s178 = scalar_lea.vmem %s1, %s177
          %s179 = smul.u32 4, %s22
        $region20: #{adapter_forward.1} parent=11 // pred_fallthru
          _
        // Predicated region
        $region21: #{adapter_forward.1} parent=11 // pred_check
          %p180 = pneg %p98
        $region22: #{adapter_forward.1} parent=11 // pred_check_branch
          %182 = sbr.rel (%p180) target = $region24
        $region23: #{adapter_forward.1} parent=11 // pred_region
          _
        $region24: #{adapter_forward.1} parent=11 // pred_fallthru
          _
        // Predicated region
        $region25: #{adapter_forward.1} parent=11 // pred_check
          %p183 = pneg %p119
        $region26: #{adapter_forward.1} parent=11 // pred_check_branch
          %185 = sbr.rel (%p183) target = $region28
        $region27: #{adapter_forward.1} parent=11 // pred_region
          _
        $region28: #{adapter_forward.1} parent=11 // pred_fallthru
          _
      $region12: #{adapter_forward.1} parent=5 // pred_fallthru
        _
      %p186 = scmp.lt.s32.totalorder %s13, 2
      // Predicated region
      $region29: #{adapter_forward.1} parent=5 // pred_check
        %p187 = pneg %p186
      $region30: #{adapter_forward.1} parent=5 // pred_check_branch
        %189 = sbr.rel (%p187) target = $region32
      $region31: #{adapter_forward.1} parent=5 // pred_region
        _
      $region32: #{adapter_forward.1} parent=5 // pred_fallthru
        _
      %p190 = scmp.le.s32.totalorder 1, %s13
      %p191 = scmp.lt.s32.totalorder %s13, 3
      %p192 = pnand %p190, %p191
      %p193 = pneg %p192
      // Predicated region
      $region33: #{adapter_forward.1} parent=5 // pred_check
        _
      $region34: #{adapter_forward.1} parent=5 // pred_check_branch
        %195 = sbr.rel (%p192) target = $region36
      $region35: #{adapter_forward.1} parent=5 // pred_region
        %s196 = ssub.s32 %s13, 1
        %s197 = smul.u32 4, %s22
        %p198 = scmp.lt.s32.totalorder %s197, 3
        %s199 = scalar_select %p198, %s197, 3
        %s200 = smul.addr %s199, 8
        %s201 = scalar_lea.vmem %s0, %s200
        %p202 = pneg %p51
        %p203 = pneg %p48
        %s204 = smul.u32 4, %s22
        %p205 = scmp.lt.s32.totalorder %s204, 3
        %s206 = scalar_select %p205, %s204, 3
        %s207 = smul.addr %s206, 8
        %s208 = scalar_lea.vmem %s1, %s207
        %p209 = pneg %p77
        %p210 = pneg %p74
        %p211 = pneg %p98
        %p212 = pneg %p95
        %p213 = pneg %p119
        %p214 = pneg %p116
        %p215 = pneg %p147
        %p216 = pneg %p144
        %s217 = sand.u32 %s134, 1
        %s218 = scalar_lea.sflag [#allocation3], %s217
        %s219 = sand.u32 %s134, 1
        %s220 = smul.addr %s219, 32
        %s221 = scalar_lea.vmem [#allocation2], %s220
        %s222 = smul.u32 4, %s22
        %p223 = scmp.lt.s32.totalorder %s222, 3
        %s224 = scalar_select %p223, %s222, 3
        %s225 = smul.addr %s224, 8
        %s226 = scalar_lea.vmem %s0, %s225
        %s227 = smul.u32 4, %s22
        %s228 = smul.u32 4, %s22
        %p229 = scmp.lt.s32.totalorder %s228, 3
        %s230 = scalar_select %p229, %s228, 3
        %s231 = smul.addr %s230, 8
        %s232 = scalar_lea.vmem %s1, %s231
        %s233 = smul.u32 4, %s22
        %s234 = smul.u32 4, %s22
        %p235 = scmp.gt.s32.totalorder %s23, 0
        %s236 = scalar_select %p235, 1, 0
        %s237 = scvt.s32.f32 %s236
        %v238 = vld [vmem:[%s226] sm:$0xff]
        %v239 = vld [vmem:[%s226 + $0x8] sm:$0xff]
        %v240 = vld [vmem:[%s226 + $0x10] sm:$0xff]
        %v241 = vld [vmem:[%s226 + $0x18] sm:$0xff]
        %v242 = vld [vmem:[%s232] sm:$0xff]
        %v243 = vld [vmem:[%s232 + $0x8] sm:$0xff]
        %v244 = vld [vmem:[%s232 + $0x10] sm:$0xff]
        %v245 = vld [vmem:[%s232 + $0x18] sm:$0xff]
        %v246 = vstv %s237
        %v247 = vmul.f32 %v246, %v242
        %v248 = vmul.f32 %v246, %v243
        %v249 = vmul.f32 %v246, %v244
        %v250 = vmul.f32 %v246, %v245
        %v251 = vadd.f32 %v238, %v247
        %v252 = vadd.f32 %v239, %v248
        %v253 = vadd.f32 %v240, %v249
        %v254 = vadd.f32 %v241, %v250
        %v255 = vmul.f32 %v251, %v251
        %v256 = vmul.f32 %v252, %v252
        %v257 = vmul.f32 %v253, %v253
        %v258 = vmul.f32 %v254, %v254
        %259 = vadd.xlane.f32.xlu0 %v255
        %v260 = vpop.xlane.xlu0 %259
        %261 = vadd.xlane.f32.xlu0 %v256
        %v262 = vpop.xlane.xlu0 %261
        %263 = vadd.xlane.f32.xlu0 %v257
        %v264 = vpop.xlane.xlu0 %263
        %265 = vadd.xlane.f32.xlu0 %v258
        %v266 = vpop.xlane.xlu0 %265
        %v267 = vrsqrt.pop %v260
        %v268 = vrsqrt.pop %v262
        %v269 = vrsqrt.pop %v264
        %v270 = vrsqrt.pop %v266
        %v271 = vmul.f32 %v251, %v267
        %v272 = vmul.f32 %v252, %v268
        %v273 = vmul.f32 %v253, %v269
        %v274 = vmul.f32 %v254, %v270
        %v275 = vld [vmem:[%s2] sm:$0xff]
        %v276 = vld [vmem:[%s2 + $0x8] sm:$0xff]
        %v277 = vld [vmem:[%s2 + $0x10] sm:$0xff]
        %v278 = vld [vmem:[%s2 + $0x18] sm:$0xff]
        %v279 = vld [vmem:[%s2 + $0x20] sm:$0xff]
        %v280 = vld [vmem:[%s2 + $0x28] sm:$0xff]
        %v281 = vld [vmem:[%s2 + $0x30] sm:$0xff]
        %v282 = vld [vmem:[%s2 + $0x38] sm:$0xff]
        %v283 = vld [vmem:[%s2 + $0x40] sm:$0xff]
        %v284 = vld [vmem:[%s2 + $0x48] sm:$0xff]
        %v285 = vld [vmem:[%s2 + $0x50] sm:$0xff]
        %v286 = vld [vmem:[%s2 + $0x58] sm:$0xff]
        %v287 = vld [vmem:[%s2 + $0x60] sm:$0xff]
        %v288 = vld [vmem:[%s2 + $0x68] sm:$0xff]
        %v289 = vld [vmem:[%s2 + $0x70] sm:$0xff]
        %v290 = vld [vmem:[%s2 + $0x78] sm:$0xff]
        %v291 = vld [vmem:[%s3] sm:$0x1]
        %v293 = vlaneseq
        %v294 = vshrl.u32 %v293, 7
        %v295 = vsub.s32 0, %v294
        %v296 = vrot.slane %v291, %v295
        %298 = vmatprep.subr.mxu0 0.0
        %299 = vmatpush1.msra.mxu0 %v275
        %300 = vmatprep.subr.mxu0 0.0
        %301 = vmatpush1.msra.mxu0 %v276
        %302 = vmatprep.subr.mxu0 0.0
        %303 = vmatpush1.msra.mxu0 %v277
        %304 = vmatprep.subr.mxu0 0.0
        %305 = vmatpush1.msra.mxu0 %v278
        %306 = vmatprep.subr.mxu0 0.0
        %307 = vmatpush1.msra.mxu0 %v279
        %308 = vmatprep.subr.mxu0 0.0
        %309 = vmatpush1.msra.mxu0 %v280
        %310 = vmatprep.subr.mxu0 0.0
        %311 = vmatpush1.msra.mxu0 %v281
        %312 = vmatprep.subr.mxu0 0.0
        %313 = vmatpush1.msra.mxu0 %v282
        %314 = vmatprep.subr.mxu0 0.0
        %315 = vmatpush1.msra.mxu0 %v283
        %316 = vmatprep.subr.mxu0 0.0
        %317 = vmatpush1.msra.mxu0 %v284
        %318 = vmatprep.subr.mxu0 0.0
        %319 = vmatpush1.msra.mxu0 %v285
        %320 = vmatprep.subr.mxu0 0.0
        %321 = vmatpush1.msra.mxu0 %v286
        %322 = vmatprep.subr.mxu0 0.0
        %323 = vmatpush1.msra.mxu0 %v287
        %324 = vmatprep.subr.mxu0 0.0
        %325 = vmatpush1.msra.mxu0 %v288
        %326 = vmatprep.subr.mxu0 0.0
        %327 = vmatpush1.msra.mxu0 %v289
        %328 = vmatprep.subr.mxu0 0.0
        %329 = vmatpush1.msra.mxu0 %v290
        %330 = vmatprep.subr.mxu0 0.0
        %331 = vmatpush1.msra.mxu0 0.0
        %332 = vmatprep.subr.mxu0 0.0
        %333 = vmatpush1.msra.mxu0 0.0
        %334 = vmatprep.subr.mxu0 0.0
        %335 = vmatpush1.msra.mxu0 0.0
        %336 = vmatprep.subr.mxu0 0.0
        %337 = vmatpush1.msra.mxu0 0.0
        %338 = vmatprep.subr.mxu0 0.0
        %339 = vmatpush1.msra.mxu0 0.0
        %340 = vmatprep.subr.mxu0 0.0
        %341 = vmatpush1.msra.mxu0 0.0
        %342 = vmatprep.subr.mxu0 0.0
        %343 = vmatpush1.msra.mxu0 0.0
        %344 = vmatprep.subr.mxu0 0.0
        %345 = vmatpush1.msra.mxu0 0.0
        %346 = vmatprep.subr.mxu0 0.0
        %347 = vmatpush1.msra.mxu0 0.0
        %348 = vmatprep.subr.mxu0 0.0
        %349 = vmatpush1.msra.mxu0 0.0
        %350 = vmatprep.subr.mxu0 0.0
        %351 = vmatpush1.msra.mxu0 0.0
        %352 = vmatprep.subr.mxu0 0.0
        %353 = vmatpush1.msra.mxu0 0.0
        %354 = vmatprep.subr.mxu0 0.0
        %355 = vmatpush1.msra.mxu0 0.0
        %356 = vmatprep.subr.mxu0 0.0
        %357 = vmatpush1.msra.mxu0 0.0
        %358 = vmatprep.subr.mxu0 0.0
        %359 = vmatpush1.msra.mxu0 0.0
        %360 = vmatprep.subr.mxu0 0.0
        %361 = vmatpush1.msra.mxu0 0.0
        %362 = vmatprep.mubr.f32.mxu0 0.0
        %363 = vmatmul.mubr.f32.gmra.mrb[0].mxu0 %v271
        %v364 = vpop.f32.mrb[0].mxu0
        %v365 = vadd.f32 %v296, %v364
        %v366 = vpop.f32.mrb[0].mxu0
        %367 = vmatprep.mubr.f32.mxu0 0.0
        %368 = vmatmul.mubr.f32.gmra.mrb[0].mxu0 %v272
        %v369 = vpop.f32.mrb[0].mxu0
        %v370 = vadd.f32 %v296, %v369
        %v371 = vpop.f32.mrb[0].mxu0
        %372 = vmatprep.mubr.f32.mxu0 0.0
        %373 = vmatmul.mubr.f32.gmra.mrb[0].mxu0 %v273
        %v374 = vpop.f32.mrb[0].mxu0
        %v375 = vadd.f32 %v296, %v374
        %v376 = vpop.f32.mrb[0].mxu0
        %377 = vmatprep.mubr.f32.mxu0 0.0
        %378 = vmatmul.mubr.f32.gmra.mrb[0].mxu0 %v274
        %v379 = vpop.f32.mrb[0].mxu0
        %v380 = vadd.f32 %v296, %v379
        %v381 = vpop.f32.mrb[0].mxu0
        %382 = vdwg.mxu0
        %v383 = vmul.f32 %v251, 0.5
        %v384 = vmul.f32 %v252, 0.5
        %v385 = vmul.f32 %v253, 0.5
        %v386 = vmul.f32 %v254, 0.5
        %v387 = vmul.f32 %v365, 0.5
        %v388 = vmul.f32 %v370, 0.5
        %v389 = vmul.f32 %v375, 0.5
        %v390 = vmul.f32 %v380, 0.5
        %v391 = vadd.f32 %v383, %v387
        %v392 = vadd.f32 %v384, %v388
        %v393 = vadd.f32 %v385, %v389
        %v394 = vadd.f32 %v386, %v390
        %395 = vst [vmem:[%s221] sm:$0xff] %v391
        %396 = vst [vmem:[%s221 + $0x8] sm:$0xff] %v392
        %397 = vst [vmem:[%s221 + $0x10] sm:$0xff] %v393
        %398 = vst [vmem:[%s221 + $0x18] sm:$0xff] %v394
        %s399 = sand.u32 %s134, 1
        %s400 = scalar_lea.sflag [#allocation3], %s399
        %s401 = sand.u32 %s134, 1
        %s402 = smul.addr %s401, 32
        %s403 = scalar_lea.vmem [#allocation2], %s402
        // Predicated region
        $region37: #{adapter_forward.1} parent=35 // pred_check
          %p404 = pneg %p144
        $region38: #{adapter_forward.1} parent=35 // pred_check_branch
          %406 = sbr.rel (%p404) target = $region40
        $region39: #{adapter_forward.1} parent=35 // pred_region
          %s407 = smul.u32 4, %s22
          %s409 = ssub.s32 512, 512
          %410 = vsyncadd %s400, %s409
          %s411 = smul.addr %s23, 4
          %s412 = sadd.s32 %s407, %s411
          %s413 = smul.addr %s412, 128
          %s414 = scalar_lea.hbm %s4, %s413
          %s415 = sshll.u32 %s403, 4
          %s416 = int_to_ptr.vmem [resolvable:$true] %s415
          %421 = dma.vmem_to_hbm [thread:$0]  %s416, 512, %s414, %s400, 128, 128, 8
        $region40: #{adapter_forward.1} parent=35 // pred_fallthru
          _
      $region36: #{adapter_forward.1} parent=5 // pred_fallthru
        _
      %p422 = scmp.le.s32.totalorder 2, %s13
      // Predicated region
      $region41: #{adapter_forward.1} parent=5 // pred_check
        %p423 = pneg %p422
      $region42: #{adapter_forward.1} parent=5 // pred_check_branch
        %425 = sbr.rel (%p423) target = $region44
      $region43: #{adapter_forward.1} parent=5 // pred_region
        %s426 = ssub.s32 %s13, 2
        // Predicated region
        $region45: #{adapter_forward.1} parent=43 // pred_check
          %p427 = pneg %p150
        $region46: #{adapter_forward.1} parent=43 // pred_check_branch
          %429 = sbr.rel (%p427) target = $region48
        $region47: #{adapter_forward.1} parent=43 // pred_region
          %s430 = sand.u32 %s135, 1
          %s431 = scalar_lea.sflag [#allocation3], %s430
          %s432 = sand.u32 %s135, 1
          %s433 = smul.addr %s432, 32
          %s434 = scalar_lea.vmem [#allocation2], %s433
          %435 = dma.done %s431, 512
        $region48: #{adapter_forward.1} parent=43 // pred_fallthru
          _
      $region44: #{adapter_forward.1} parent=5 // pred_fallthru
        _
    $region6: #{adapter_forward.1} parent=1 // loop_footer
      %s17 = sadd.s32 1, %s13
    $region7: #{adapter_forward.1} parent=1 // loop_footer_branch
      %12 = sbr.rel target = $region3
    $region8: #{adapter_forward.1} parent=1 // loop_exit
      _
    %436 = vsyncpa [#allocation3], 1
    %s437 = scalar_lea.sflag [#allocation3], 1
    %438 = vsyncpa %s437, 1

</llo_original>
